<compile_context>
chip_gen: v7x
topology: tpu7x:2x2x1
jax: 0.10.0
libtpu: 0.0.40
codegen_flags: <defaults>
</compile_context>

<pallas_src>
import jax
import jax.numpy as jnp
from jax.experimental import pallas as pl
from jax.experimental.pallas import tpu as pltpu


def _round_up(n, m):
    return ((n + m - 1) // m) * m


def _mlp_policy_kernel(x_ref, w1_ref, b1_ref, w2_ref, b2_ref, w3_ref, b3_ref,
                       o_ref):
    wdt = w1_ref.dtype  # matmul input dtype (f32 or bf16); accumulation is f32
    x = x_ref[...].astype(wdt)
    # Layer 1: Linear + ReLU
    h = jnp.dot(x, w1_ref[...], preferred_element_type=jnp.float32)
    h = jnp.maximum(h + b1_ref[...], 0.0)
    # Layer 2: Linear + ReLU
    h = jnp.dot(h.astype(wdt), w2_ref[...], preferred_element_type=jnp.float32)
    h = jnp.maximum(h + b2_ref[...], 0.0)
    # Output layer: Linear + ReLU (yes, ReLU on the output layer too, per __init__)
    h = jnp.dot(h.astype(wdt), w3_ref[...], preferred_element_type=jnp.float32)
    h = jnp.maximum(h + b3_ref[...], 0.0)
    # Softmax over the (unpadded) output columns.  Exact divide: policy heads
    # need rows that sum to 1 to f32 precision (approx reciprocal is ~1e-3).
    m = jnp.max(h, axis=-1, keepdims=True)
    e = jnp.exp(h - m)
    denom = jnp.sum(e, axis=-1, keepdims=True)
    o_ref[...] = (e / denom).astype(o_ref.dtype)


def policy_grad_forward(x, params, mask=None, *, block_batch=4096, use_bf16=True):
    """Runs the full MLP + softmax as a single batch-tiled Pallas kernel.

    x: (B, input_dim) float32
    params: dict with w1 (in,h0), b1 (1,h0), w2 (h0,h1), b2 (1,h1),
            w3 (h1,out), b3 (1,out)   (weights stored (in,out): x @ W == x @ W_pt.T)
    mask: unused (matches the reference forward, which ignores it).
    """
    del mask  # unused in the reference forward
    B, in_dim = x.shape
    h0 = params["w1"].shape[1]
    h1 = params["w2"].shape[1]
    out_dim = params["w3"].shape[1]

    wdt = jnp.bfloat16 if use_bf16 else jnp.float32
    # Weights are tiny & VMEM-resident; cast once here (not per grid step).
    w1 = params["w1"].astype(wdt)
    w2 = params["w2"].astype(wdt)
    w3 = params["w3"].astype(wdt)
    b1 = params["b1"].astype(jnp.float32)
    b2 = params["b2"].astype(jnp.float32)
    b3 = params["b3"].astype(jnp.float32)

    # Batch tile: multiple of 16 (bf16 sublane packing), large enough to
    # amortize per-step overhead, but capped so the grid has >= 2 steps
    # whenever B allows (lets v7x shard the batch across both TensorCores).
    tb = min(_round_up(block_batch, 16), _round_up(pl.cdiv(B, 2), 16))
    tb = max(16, tb)
    grid = (pl.cdiv(B, tb),)  # ragged last block handled by Pallas masking

    tile_map = lambda i: (i, 0)    # streamed per batch tile
    const_map = lambda i: (0, 0)   # same block every step -> stays VMEM-resident

    itemsize = jnp.dtype(wdt).itemsize
    flops = 2 * B * (in_dim * h0 + h0 * h1 + h1 * out_dim)
    bytes_accessed = (x.size * 4
                      + (w1.size + w2.size + w3.size) * itemsize
                      + (b1.size + b2.size + b3.size) * 4
                      + B * out_dim * 4)

    out = pl.pallas_call(
        _mlp_policy_kernel,
        out_shape=jax.ShapeDtypeStruct((B, out_dim), jnp.float32),
        grid=grid,
        in_specs=[
            pl.BlockSpec((tb, in_dim), tile_map),      # x, native f32, unpadded
            pl.BlockSpec((in_dim, h0), const_map),
            pl.BlockSpec((1, h0), const_map),
            pl.BlockSpec((h0, h1), const_map),
            pl.BlockSpec((1, h1), const_map),
            pl.BlockSpec((h1, out_dim), const_map),
            pl.BlockSpec((1, out_dim), const_map),
        ],
        out_specs=pl.BlockSpec((tb, out_dim), tile_map),  # narrow output, no slab
        compiler_params=pltpu.CompilerParams(
            dimension_semantics=("parallel",)),
        cost_estimate=pl.CostEstimate(
            flops=flops,
            transcendentals=B * out_dim,
            bytes_accessed=bytes_accessed),
    )(x, w1, b1, w2, b2, w3, b3)

    return out


def init_params(key, input_dim, hidden_dims, output_dim):
    """Deterministic init mimicking PyTorch nn.Linear default U(-1/sqrt(fan_in), 1/sqrt(fan_in))."""
    dims = [input_dim] + list(hidden_dims) + [output_dim]
    params = {}
    for i in range(len(dims) - 1):
        fan_in, fan_out = dims[i], dims[i + 1]
        key, kw, kb = jax.random.split(key, 3)
        bound = 1.0 / (fan_in ** 0.5)
        params[f"w{i+1}"] = jax.random.uniform(
            kw, (fan_in, fan_out), jnp.float32, -bound, bound)
        params[f"b{i+1}"] = jax.random.uniform(
            kb, (1, fan_out), jnp.float32, -bound, bound)
    return params


if __name__ == "__main__":
    key = jax.random.PRNGKey(0)
    batch = 200            # non-multiple of the tile -> exercises the ragged last block
    input_dim = 32
    hidden_dims = [64, 64]
    output_dim = 16

    key, kx = jax.random.split(key)
    x = jax.random.normal(kx, (batch, input_dim), jnp.float32)
    mask = jnp.ones((batch, output_dim), jnp.float32)  # unused, like the reference
    params = init_params(key, input_dim, hidden_dims, output_dim)

    def ref(x, p, wdt):
        def lin(h, w, b):
            y = jnp.dot(h.astype(wdt), w.astype(wdt),
                        preferred_element_type=jnp.float32) + b
            return jnp.maximum(y, 0.0)
        h = lin(x, p["w1"], p["b1"])
        h = lin(h, p["w2"], p["b2"])
        h = lin(h, p["w3"], p["b3"])
        return jax.nn.softmax(h, axis=-1)

    # f32-matmul path (small tile -> 4 grid steps incl. a ragged block of 8 rows).
    out_f32 = jax.block_until_ready(
        policy_grad_forward(x, params, mask, block_batch=64, use_bf16=False))
    assert out_f32.shape == (batch, output_dim)
    ref_f32 = ref(x, params, jnp.float32)
    # Loose-ish tolerance: XLA's and Mosaic's default f32 matmul pass counts may differ.
    assert jnp.allclose(out_f32, ref_f32, atol=2e-3, rtol=2e-2), \
        float(jnp.max(jnp.abs(out_f32 - ref_f32)))
    assert jnp.allclose(jnp.sum(out_f32, axis=-1), 1.0, atol=1e-4)

    # bf16-matmul fast path (default): both sides cast identically -> tight match.
    out_bf16 = jax.block_until_ready(policy_grad_forward(x, params, mask, use_bf16=True))
    assert out_bf16.shape == (batch, output_dim)
    ref_bf = ref(x, params, jnp.bfloat16)
    assert jnp.allclose(out_bf16, ref_bf, atol=2e-4, rtol=1e-3), \
        float(jnp.max(jnp.abs(out_bf16 - ref_bf)))
    assert jnp.allclose(jnp.sum(out_bf16, axis=-1), 1.0, atol=1e-4)

    # The reference module only *prints* when the softmax output is all zeros,
    # which cannot happen (rows always sum to 1); nothing to compute for it.
    print("KERNEL_OK")
</pallas_src>

<mosaic_0001>
module attributes {stable_mosaic.version = 11 : i64} {
  func.func @_mlp_policy_kernel(%arg0: i32, %arg1: memref<64x32xf32, #tpu.memory_space<vmem>>, %arg2: memref<32x64xf32, #tpu.memory_space<vmem>>, %arg3: memref<1x64xf32, #tpu.memory_space<vmem>>, %arg4: memref<64x64xf32, #tpu.memory_space<vmem>>, %arg5: memref<1x64xf32, #tpu.memory_space<vmem>>, %arg6: memref<64x16xf32, #tpu.memory_space<vmem>>, %arg7: memref<1x16xf32, #tpu.memory_space<vmem>>, %arg8: memref<64x16xf32, #tpu.memory_space<vmem>>) attributes {dimension_semantics = [#tpu.dimension_semantics<parallel>], iteration_bounds = array<i64: 4>, scalar_prefetch = 0 : i64, scratch_operands = 0 : i64, tpu.core_type = #tpu.core_type<tc>, window_params = [{transform_indices = @transform_0, window_bounds = array<i64: 64, 32>}, {pipeline_mode = #tpu.pipeline_mode<synchronous>, transform_indices = @transform_1, window_bounds = array<i64: 32, 64>}, {pipeline_mode = #tpu.pipeline_mode<synchronous>, transform_indices = @transform_2, window_bounds = array<i64: 1, 64>}, {pipeline_mode = #tpu.pipeline_mode<synchronous>, transform_indices = @transform_3, window_bounds = array<i64: 64, 64>}, {pipeline_mode = #tpu.pipeline_mode<synchronous>, transform_indices = @transform_4, window_bounds = array<i64: 1, 64>}, {pipeline_mode = #tpu.pipeline_mode<synchronous>, transform_indices = @transform_5, window_bounds = array<i64: 64, 16>}, {pipeline_mode = #tpu.pipeline_mode<synchronous>, transform_indices = @transform_6, window_bounds = array<i64: 1, 16>}, {transform_indices = @transform_7, window_bounds = array<i64: 64, 16>}]} {
    %c0 = arith.constant 0 : index
    %c0_0 = arith.constant 0 : index
    %0 = vector.load %arg1[%c0, %c0_0] : memref<64x32xf32, #tpu.memory_space<vmem>>, vector<64x32xf32>
    %c0_1 = arith.constant 0 : index
    %c0_2 = arith.constant 0 : index
    %1 = vector.load %arg2[%c0_1, %c0_2] : memref<32x64xf32, #tpu.memory_space<vmem>>, vector<32x64xf32>
    %cst = arith.constant dense<0.000000e+00> : vector<64x64xf32>
    %2 = tpu.matmul %0, %1, %cst {dimension_numbers = #tpu.dot_dimension_numbers<[1], [0], [0], [1], [0, 0, 1, 1], [], []>} : vector<64x32xf32>, vector<32x64xf32>, vector<64x64xf32> -> vector<64x64xf32>
    %c0_3 = arith.constant 0 : index
    %c0_4 = arith.constant 0 : index
    %3 = vector.load %arg3[%c0_3, %c0_4] : memref<1x64xf32, #tpu.memory_space<vmem>>, vector<1x64xf32>
    %4 = vector.broadcast %3 : vector<1x64xf32> to vector<64x64xf32>
    %5 = arith.addf %2, %4 : vector<64x64xf32>
    %cst_5 = arith.constant 0.000000e+00 : f32
    %6 = vector.broadcast %cst_5 : f32 to vector<64x64xf32>
    %7 = arith.maximumf %5, %6 : vector<64x64xf32>
    %c0_6 = arith.constant 0 : index
    %c0_7 = arith.constant 0 : index
    %8 = vector.load %arg4[%c0_6, %c0_7] : memref<64x64xf32, #tpu.memory_space<vmem>>, vector<64x64xf32>
    %cst_8 = arith.constant dense<0.000000e+00> : vector<64x64xf32>
    %9 = tpu.matmul %7, %8, %cst_8 {dimension_numbers = #tpu.dot_dimension_numbers<[1], [0], [0], [1], [0, 0, 1, 1], [], []>} : vector<64x64xf32>, vector<64x64xf32>, vector<64x64xf32> -> vector<64x64xf32>
    %c0_9 = arith.constant 0 : index
    %c0_10 = arith.constant 0 : index
    %10 = vector.load %arg5[%c0_9, %c0_10] : memref<1x64xf32, #tpu.memory_space<vmem>>, vector<1x64xf32>
    %11 = vector.broadcast %10 : vector<1x64xf32> to vector<64x64xf32>
    %12 = arith.addf %9, %11 : vector<64x64xf32>
    %cst_11 = arith.constant 0.000000e+00 : f32
    %13 = vector.broadcast %cst_11 : f32 to vector<64x64xf32>
    %14 = arith.maximumf %12, %13 : vector<64x64xf32>
    %c0_12 = arith.constant 0 : index
    %c0_13 = arith.constant 0 : index
    %15 = vector.load %arg6[%c0_12, %c0_13] : memref<64x16xf32, #tpu.memory_space<vmem>>, vector<64x16xf32>
    %cst_14 = arith.constant dense<0.000000e+00> : vector<64x16xf32>
    %16 = tpu.matmul %14, %15, %cst_14 {dimension_numbers = #tpu.dot_dimension_numbers<[1], [0], [0], [1], [0, 0, 1, 1], [], []>} : vector<64x64xf32>, vector<64x16xf32>, vector<64x16xf32> -> vector<64x16xf32>
    %c0_15 = arith.constant 0 : index
    %c0_16 = arith.constant 0 : index
    %17 = vector.load %arg7[%c0_15, %c0_16] : memref<1x16xf32, #tpu.memory_space<vmem>>, vector<1x16xf32>
    %18 = vector.broadcast %17 : vector<1x16xf32> to vector<64x16xf32>
    %19 = arith.addf %16, %18 : vector<64x16xf32>
    %cst_17 = arith.constant 0.000000e+00 : f32
    %20 = vector.broadcast %cst_17 : f32 to vector<64x16xf32>
    %21 = arith.maximumf %19, %20 : vector<64x16xf32>
    %cst_18 = arith.constant dense<0xFF800000> : vector<64xf32>
    %22 = vector.multi_reduction <maximumf>, %21, %cst_18 [1] : vector<64x16xf32> to vector<64xf32>
    %23 = vector.shape_cast %22 : vector<64xf32> to vector<64x1xf32>
    %24 = vector.broadcast %23 : vector<64x1xf32> to vector<64x16xf32>
    %25 = arith.subf %21, %24 : vector<64x16xf32>
    %26 = math.exp %25 : vector<64x16xf32>
    %cst_19 = arith.constant dense<0.000000e+00> : vector<64xf32>
    %27 = vector.multi_reduction <add>, %26, %cst_19 [1] : vector<64x16xf32> to vector<64xf32>
    %28 = vector.shape_cast %27 : vector<64xf32> to vector<64x1xf32>
    %29 = vector.broadcast %28 : vector<64x1xf32> to vector<64x16xf32>
    %30 = arith.divf %26, %29 : vector<64x16xf32>
    %c0_20 = arith.constant 0 : index
    %c0_21 = arith.constant 0 : index
    %31 = vector.load %arg8[%c0_20, %c0_21] : memref<64x16xf32, #tpu.memory_space<vmem>>, vector<64x16xf32>
    tpu.vector_store %arg8[%c0_20, %c0_21], %30 {strides = array<i32>} : memref<64x16xf32, #tpu.memory_space<vmem>>, vector<64x16xf32>,
    return
  }
  func.func @transform_0(%arg0: i32) -> (i32, i32) {
    %c0_i32 = arith.constant 0 : i32
    %c0_i32_0 = arith.constant 0 : i32
    return %arg0, %c0_i32 : i32, i32
  }
  func.func @transform_1(%arg0: i32) -> (i32, i32) {
    %c0_i32 = arith.constant 0 : i32
    %c0_i32_0 = arith.constant 0 : i32
    %c0_i32_1 = arith.constant 0 : i32
    return %c0_i32, %c0_i32_0 : i32, i32
  }
  func.func @transform_2(%arg0: i32) -> (i32, i32) {
    %c0_i32 = arith.constant 0 : i32
    %c0_i32_0 = arith.constant 0 : i32
    %c0_i32_1 = arith.constant 0 : i32
    return %c0_i32, %c0_i32_0 : i32, i32
  }
  func.func @transform_3(%arg0: i32) -> (i32, i32) {
    %c0_i32 = arith.constant 0 : i32
    %c0_i32_0 = arith.constant 0 : i32
    %c0_i32_1 = arith.constant 0 : i32
    return %c0_i32, %c0_i32_0 : i32, i32
  }
  func.func @transform_4(%arg0: i32) -> (i32, i32) {
    %c0_i32 = arith.constant 0 : i32
    %c0_i32_0 = arith.constant 0 : i32
    %c0_i32_1 = arith.constant 0 : i32
    return %c0_i32, %c0_i32_0 : i32, i32
  }
  func.func @transform_5(%arg0: i32) -> (i32, i32) {
    %c0_i32 = arith.constant 0 : i32
    %c0_i32_0 = arith.constant 0 : i32
    %c0_i32_1 = arith.constant 0 : i32
    return %c0_i32, %c0_i32_0 : i32, i32
  }
  func.func @transform_6(%arg0: i32) -> (i32, i32) {
    %c0_i32 = arith.constant 0 : i32
    %c0_i32_0 = arith.constant 0 : i32
    %c0_i32_1 = arith.constant 0 : i32
    return %c0_i32, %c0_i32_0 : i32, i32
  }
  func.func @transform_7(%arg0: i32) -> (i32, i32) {
    %c0_i32 = arith.constant 0 : i32
    %c0_i32_0 = arith.constant 0 : i32
    return %arg0, %c0_i32 : i32, i32
  }
}

</mosaic_0001>

<llo_original>
// kernel: tpu_custom_call.1
$region0: #{tpu_custom_call.1}
  #allocation0 [shape = 'u32[]', space=smem, size = 0x4, offset = 0x4, fixed_abs, tag = 'smem constant byte address 0x4 - core index']
  #allocation1 [shape = 'u32[144,128]{1,0:T(1,128)}', space=vmem, size = 0x12000, scoped, tag = 'internal scratch']
  %s0 = inlined_call_operand.vmem [shape: f32[200,32], index: 0, kind: input, shape index: {}]
  %s1 = inlined_call_operand.vmem [shape: f32[32,64], index: 1, kind: input, shape index: {}]
  %s2 = inlined_call_operand.vmem [shape: f32[1,64], index: 2, kind: input, shape index: {}]
  %s3 = inlined_call_operand.vmem [shape: f32[64,64], index: 3, kind: input, shape index: {}]
  %s4 = inlined_call_operand.vmem [shape: f32[1,64], index: 4, kind: input, shape index: {}]
  %s5 = inlined_call_operand.vmem [shape: f32[64,16], index: 5, kind: input, shape index: {}]
  %s6 = inlined_call_operand.vmem [shape: f32[1,16], index: 6, kind: input, shape index: {}]
  %s7 = inlined_call_operand.vmem [shape: f32[200,16], index: 7, kind: output, shape index: {}]
  %s8 = sld [smem:[#allocation0]]
  $region109: #{tpu_custom_call.1} parent=0
    _
  %s10 = ssub.s32 1, %s8
  %s11 = scalar_select 0, %s10, %s8
  $region1: #{tpu_custom_call.1} parent=0
    #allocation2 [shape = 'u8[65536]{0}', space=vmem, size = 0x10000, scoped, tag = 'output window, operand 0']
    loop: start=0, step=1, limit=6
    $region2: #{tpu_custom_call.1} parent=1 // loop_pre_header
      _
    $region3: #{tpu_custom_call.1} parent=1 // loop_header
      %s13 = sphi 0, %s17
      %p14 = scmp.ge.s32.totalorder %s13, 6
      %s23 = sphi 0, %s25
      %s26 = sphi 0, %s23
      %s27 = sphi 0, %s26
      %s43 = sphi 0, %s27
      %s47 = sphi 0, %s47
      %s49 = sphi 0, %s47
      %s50 = sphi 0, %s49
      %s64 = sphi 0, %s50
      %s68 = sphi 0, %s68
      %s70 = sphi 0, %s68
      %s71 = sphi 0, %s70
      %s85 = sphi 0, %s71
      %s89 = sphi 0, %s89
      %s91 = sphi 0, %s89
      %s92 = sphi 0, %s91
      %s106 = sphi 0, %s92
      %s110 = sphi 0, %s110
      %s112 = sphi 0, %s110
      %s113 = sphi 0, %s112
      %s127 = sphi 0, %s113
      %s131 = sphi 0, %s131
      %s133 = sphi 0, %s131
      %s134 = sphi 0, %s133
      %s148 = sphi 0, %s134
      %s152 = sphi 0, %s152
      %s154 = sphi 0, %s152
      %s155 = sphi 0, %s154
      %s169 = sphi 0, %s155
      %s175 = sphi 0, %s177
      %s178 = sphi 0, %s175
      %s179 = sphi 0, %s178
      %s195 = sphi 0, %s179
    $region4: #{tpu_custom_call.1} parent=1 // loop_header_branch
      %16 = sbr.rel (%p14) target = $region8
    $region5: #{tpu_custom_call.1} parent=1 // loop_body
      %s18 = ssub.s32 %s13, 1
      %s19 = ssub.s32 %s13, 2
      %s20 = sadd.s32 %s13, 1
      %s21 = ssub.s32 %s13, %s20
      %p22 = scmp.eq.s32.totalorder %s21, 0
      %s24 = sadd.s32 %s23, 1
      %s25 = scalar_select %p22, %s23, %s24
      %p28 = pneg %p22
      %p29 = scmp.eq.s32.totalorder %s13, 3
      %p30 = por %p28, %p29
      %p31 = scmp.ne.s32.totalorder %s23, %s26
      %p32 = scmp.eq.s32.totalorder %s13, 0
      %p33 = por %p31, %p32
      %p34 = scmp.ne.s32.totalorder %s23, %s26
      %p35 = scmp.eq.s32.totalorder %s18, 3
      %p36 = por %p34, %p35
      %p37 = scmp.ne.s32.totalorder %s26, %s27
      %p38 = scmp.eq.s32.totalorder %s18, 0
      %p39 = por %p37, %p38
      %p40 = scmp.ne.s32.totalorder %s26, %s27
      %p41 = scmp.eq.s32.totalorder %s19, 3
      %p42 = por %p40, %p41
      %p44 = scmp.ne.s32.totalorder %s27, %s43
      %p45 = scmp.eq.s32.totalorder %s19, 0
      %p46 = por %p44, %p45
      %s48 = sadd.s32 %s47, 1
      %p51 = scmp.eq.s32.totalorder %s13, 3
      %p52 = scmp.ne.s32.totalorder %s47, %s49
      %p53 = scmp.eq.s32.totalorder %s13, 0
      %p54 = por %p52, %p53
      %p55 = scmp.ne.s32.totalorder %s47, %s49
      %p56 = scmp.eq.s32.totalorder %s18, 3
      %p57 = por %p55, %p56
      %p58 = scmp.ne.s32.totalorder %s49, %s50
      %p59 = scmp.eq.s32.totalorder %s18, 0
      %p60 = por %p58, %p59
      %p61 = scmp.ne.s32.totalorder %s49, %s50
      %p62 = scmp.eq.s32.totalorder %s19, 3
      %p63 = por %p61, %p62
      %p65 = scmp.ne.s32.totalorder %s50, %s64
      %p66 = scmp.eq.s32.totalorder %s19, 0
      %p67 = por %p65, %p66
      %s69 = sadd.s32 %s68, 1
      %p72 = scmp.eq.s32.totalorder %s13, 3
      %p73 = scmp.ne.s32.totalorder %s68, %s70
      %p74 = scmp.eq.s32.totalorder %s13, 0
      %p75 = por %p73, %p74
      %p76 = scmp.ne.s32.totalorder %s68, %s70
      %p77 = scmp.eq.s32.totalorder %s18, 3
      %p78 = por %p76, %p77
      %p79 = scmp.ne.s32.totalorder %s70, %s71
      %p80 = scmp.eq.s32.totalorder %s18, 0
      %p81 = por %p79, %p80
      %p82 = scmp.ne.s32.totalorder %s70, %s71
      %p83 = scmp.eq.s32.totalorder %s19, 3
      %p84 = por %p82, %p83
      %p86 = scmp.ne.s32.totalorder %s71, %s85
      %p87 = scmp.eq.s32.totalorder %s19, 0
      %p88 = por %p86, %p87
      %s90 = sadd.s32 %s89, 1
      %p93 = scmp.eq.s32.totalorder %s13, 3
      %p94 = scmp.ne.s32.totalorder %s89, %s91
      %p95 = scmp.eq.s32.totalorder %s13, 0
      %p96 = por %p94, %p95
      %p97 = scmp.ne.s32.totalorder %s89, %s91
      %p98 = scmp.eq.s32.totalorder %s18, 3
      %p99 = por %p97, %p98
      %p100 = scmp.ne.s32.totalorder %s91, %s92
      %p101 = scmp.eq.s32.totalorder %s18, 0
      %p102 = por %p100, %p101
      %p103 = scmp.ne.s32.totalorder %s91, %s92
      %p104 = scmp.eq.s32.totalorder %s19, 3
      %p105 = por %p103, %p104
      %p107 = scmp.ne.s32.totalorder %s92, %s106
      %p108 = scmp.eq.s32.totalorder %s19, 0
      %p109 = por %p107, %p108
      %s111 = sadd.s32 %s110, 1
      %p114 = scmp.eq.s32.totalorder %s13, 3
      %p115 = scmp.ne.s32.totalorder %s110, %s112
      %p116 = scmp.eq.s32.totalorder %s13, 0
      %p117 = por %p115, %p116
      %p118 = scmp.ne.s32.totalorder %s110, %s112
      %p119 = scmp.eq.s32.totalorder %s18, 3
      %p120 = por %p118, %p119
      %p121 = scmp.ne.s32.totalorder %s112, %s113
      %p122 = scmp.eq.s32.totalorder %s18, 0
      %p123 = por %p121, %p122
      %p124 = scmp.ne.s32.totalorder %s112, %s113
      %p125 = scmp.eq.s32.totalorder %s19, 3
      %p126 = por %p124, %p125
      %p128 = scmp.ne.s32.totalorder %s113, %s127
      %p129 = scmp.eq.s32.totalorder %s19, 0
      %p130 = por %p128, %p129
      %s132 = sadd.s32 %s131, 1
      %p135 = scmp.eq.s32.totalorder %s13, 3
      %p136 = scmp.ne.s32.totalorder %s131, %s133
      %p137 = scmp.eq.s32.totalorder %s13, 0
      %p138 = por %p136, %p137
      %p139 = scmp.ne.s32.totalorder %s131, %s133
      %p140 = scmp.eq.s32.totalorder %s18, 3
      %p141 = por %p139, %p140
      %p142 = scmp.ne.s32.totalorder %s133, %s134
      %p143 = scmp.eq.s32.totalorder %s18, 0
      %p144 = por %p142, %p143
      %p145 = scmp.ne.s32.totalorder %s133, %s134
      %p146 = scmp.eq.s32.totalorder %s19, 3
      %p147 = por %p145, %p146
      %p149 = scmp.ne.s32.totalorder %s134, %s148
      %p150 = scmp.eq.s32.totalorder %s19, 0
      %p151 = por %p149, %p150
      %s153 = sadd.s32 %s152, 1
      %p156 = scmp.eq.s32.totalorder %s13, 3
      %p157 = scmp.ne.s32.totalorder %s152, %s154
      %p158 = scmp.eq.s32.totalorder %s13, 0
      %p159 = por %p157, %p158
      %p160 = scmp.ne.s32.totalorder %s152, %s154
      %p161 = scmp.eq.s32.totalorder %s18, 3
      %p162 = por %p160, %p161
      %p163 = scmp.ne.s32.totalorder %s154, %s155
      %p164 = scmp.eq.s32.totalorder %s18, 0
      %p165 = por %p163, %p164
      %p166 = scmp.ne.s32.totalorder %s154, %s155
      %p167 = scmp.eq.s32.totalorder %s19, 3
      %p168 = por %p166, %p167
      %p170 = scmp.ne.s32.totalorder %s155, %s169
      %p171 = scmp.eq.s32.totalorder %s19, 0
      %p172 = por %p170, %p171
      %s173 = ssub.s32 %s13, %s20
      %p174 = scmp.eq.s32.totalorder %s173, 0
      %s176 = sadd.s32 %s175, 1
      %s177 = scalar_select %p174, %s175, %s176
      %p180 = pneg %p174
      %p181 = scmp.eq.s32.totalorder %s13, 3
      %p182 = por %p180, %p181
      %p183 = scmp.ne.s32.totalorder %s175, %s178
      %p184 = scmp.eq.s32.totalorder %s13, 0
      %p185 = por %p183, %p184
      %p186 = scmp.ne.s32.totalorder %s175, %s178
      %p187 = scmp.eq.s32.totalorder %s18, 3
      %p188 = por %p186, %p187
      %p189 = scmp.ne.s32.totalorder %s178, %s179
      %p190 = scmp.eq.s32.totalorder %s18, 0
      %p191 = por %p189, %p190
      %p192 = scmp.ne.s32.totalorder %s178, %s179
      %p193 = scmp.eq.s32.totalorder %s19, 3
      %p194 = por %p192, %p193
      %p196 = scmp.ne.s32.totalorder %s179, %s195
      %p197 = scmp.eq.s32.totalorder %s19, 0
      %p198 = por %p196, %p197
      %p199 = scmp.le.s32.totalorder 1, %s13
      %p200 = scmp.lt.s32.totalorder %s13, 5
      %p201 = pnand %p199, %p200
      %p202 = pneg %p201
      // Predicated region
      $region9: #{tpu_custom_call.1} parent=5 // pred_check
        _
      $region10: #{tpu_custom_call.1} parent=5 // pred_check_branch
        %204 = sbr.rel (%p201) target = $region12
      $region11: #{tpu_custom_call.1} parent=5 // pred_region
        %s205 = ssub.s32 %s13, 1
        // Predicated region
        $region13: #{tpu_custom_call.1} parent=11 // pred_check
          %p206 = pneg %p60
        $region14: #{tpu_custom_call.1} parent=11 // pred_check_branch
          %208 = sbr.rel (%p206) target = $region16
        $region15: #{tpu_custom_call.1} parent=11 // pred_region
          _
        $region16: #{tpu_custom_call.1} parent=11 // pred_fallthru
          _
        // Predicated region
        $region17: #{tpu_custom_call.1} parent=11 // pred_check
          %p209 = pneg %p81
        $region18: #{tpu_custom_call.1} parent=11 // pred_check_branch
          %211 = sbr.rel (%p209) target = $region20
        $region19: #{tpu_custom_call.1} parent=11 // pred_region
          _
        $region20: #{tpu_custom_call.1} parent=11 // pred_fallthru
          _
        // Predicated region
        $region21: #{tpu_custom_call.1} parent=11 // pred_check
          %p212 = pneg %p102
        $region22: #{tpu_custom_call.1} parent=11 // pred_check_branch
          %214 = sbr.rel (%p212) target = $region24
        $region23: #{tpu_custom_call.1} parent=11 // pred_region
          _
        $region24: #{tpu_custom_call.1} parent=11 // pred_fallthru
          _
        // Predicated region
        $region25: #{tpu_custom_call.1} parent=11 // pred_check
          %p215 = pneg %p123
        $region26: #{tpu_custom_call.1} parent=11 // pred_check_branch
          %217 = sbr.rel (%p215) target = $region28
        $region27: #{tpu_custom_call.1} parent=11 // pred_region
          _
        $region28: #{tpu_custom_call.1} parent=11 // pred_fallthru
          _
        // Predicated region
        $region29: #{tpu_custom_call.1} parent=11 // pred_check
          %p218 = pneg %p144
        $region30: #{tpu_custom_call.1} parent=11 // pred_check_branch
          %220 = sbr.rel (%p218) target = $region32
        $region31: #{tpu_custom_call.1} parent=11 // pred_region
          _
        $region32: #{tpu_custom_call.1} parent=11 // pred_fallthru
          _
        // Predicated region
        $region33: #{tpu_custom_call.1} parent=11 // pred_check
          %p221 = pneg %p165
        $region34: #{tpu_custom_call.1} parent=11 // pred_check_branch
          %223 = sbr.rel (%p221) target = $region36
        $region35: #{tpu_custom_call.1} parent=11 // pred_region
          _
        $region36: #{tpu_custom_call.1} parent=11 // pred_fallthru
          _
      $region12: #{tpu_custom_call.1} parent=5 // pred_fallthru
        _
      %p224 = scmp.lt.s32.totalorder %s13, 4
      // Predicated region
      $region37: #{tpu_custom_call.1} parent=5 // pred_check
        %p225 = pneg %p224
      $region38: #{tpu_custom_call.1} parent=5 // pred_check_branch
        %227 = sbr.rel (%p225) target = $region40
      $region39: #{tpu_custom_call.1} parent=5 // pred_region
        // Predicated region
        $region41: #{tpu_custom_call.1} parent=39 // pred_check
          %p228 = pneg %p33
        $region42: #{tpu_custom_call.1} parent=39 // pred_check_branch
          %230 = sbr.rel (%p228) target = $region44
        $region43: #{tpu_custom_call.1} parent=39 // pred_region
          %s231 = smul.u32 8, %s13
          %s232 = ssub.s32 25, %s231
          %p233 = scmp.lt.s32.totalorder %s232, 8
          %s234 = scalar_select %p233, %s232, 8
          %s235 = smul.u32 128, %s234
          %p236 = scmp.lt.s32.totalorder %s231, 24
          %s237 = scalar_select %p236, %s231, 24
          %s238 = smul.addr %s237, 8
          %s239 = scalar_lea.vmem %s0, %s238
          %s240 = smul.u32 8, %s13
          %s241 = ssub.s32 25, %s240
          %p242 = scmp.lt.s32.totalorder %s241, 8
          %s243 = scalar_select %p242, %s241, 8
          %s244 = smul.u32 128, %s243
        $region44: #{tpu_custom_call.1} parent=39 // pred_fallthru
          _
      $region40: #{tpu_custom_call.1} parent=5 // pred_fallthru
        _
      %p245 = scmp.le.s32.totalorder 1, %s13
      %p246 = scmp.lt.s32.totalorder %s13, 5
      %p247 = pnand %p245, %p246
      %p248 = pneg %p247
      // Predicated region
      $region45: #{tpu_custom_call.1} parent=5 // pred_check
        _
      $region46: #{tpu_custom_call.1} parent=5 // pred_check_branch
        %250 = sbr.rel (%p247) target = $region48
      $region47: #{tpu_custom_call.1} parent=5 // pred_region
        %s251 = ssub.s32 %s13, 1
        %s252 = smul.u32 8, %s18
        %s253 = ssub.s32 25, %s252
        %p254 = scmp.lt.s32.totalorder %s253, 8
        %s255 = scalar_select %p254, %s253, 8
        %s256 = smul.u32 128, %s255
        %p257 = scmp.lt.s32.totalorder %s252, 24
        %s258 = scalar_select %p257, %s252, 24
        %s259 = smul.addr %s258, 8
        %s260 = scalar_lea.vmem %s0, %s259
        %p261 = pneg %p39
        %p262 = pneg %p36
        %p263 = pneg %p60
        %p264 = pneg %p57
        %p265 = pneg %p81
        %p266 = pneg %p78
        %p267 = pneg %p102
        %p268 = pneg %p99
        %p269 = pneg %p123
        %p270 = pneg %p120
        %p271 = pneg %p144
        %p272 = pneg %p141
        %p273 = pneg %p165
        %p274 = pneg %p162
        %p275 = pneg %p191
        %p276 = pneg %p188
        %s277 = sand.u32 %s178, 1
        %s278 = sand.u32 %s178, 1
        %s279 = smul.addr %s278, 64
        %s280 = scalar_lea.vmem [#allocation2], %s279
        %s281 = smul.u32 8, %s18
        %s282 = ssub.s32 25, %s281
        %p283 = scmp.lt.s32.totalorder %s282, 8
        %s284 = scalar_select %p283, %s282, 8
        %s285 = smul.u32 128, %s284
        %p286 = scmp.lt.s32.totalorder %s281, 24
        %s287 = scalar_select %p286, %s281, 24
        %s288 = smul.addr %s287, 8
        %s289 = scalar_lea.vmem %s0, %s288
        %s290 = smul.u32 8, %s18
        %s291 = ssub.s32 25, %s290
        %p292 = scmp.lt.s32.totalorder %s291, 8
        %s293 = scalar_select %p292, %s291, 8
        %s294 = smul.u32 128, %s293
        %s295 = smul.u32 8, %s18
        %s296 = ssub.s32 25, %s295
        %p297 = scmp.lt.s32.totalorder %s296, 8
        %s298 = scalar_select %p297, %s296, 8
        %s299 = smul.u32 128, %s298
        %v300 = vld [vmem:[%s289] sm:$0xff]
        %v301 = vld [vmem:[%s289 + $0x8] sm:$0xff]
        %v302 = vld [vmem:[%s289 + $0x10] sm:$0xff]
        %v303 = vld [vmem:[%s289 + $0x18] sm:$0xff]
        %v304 = vld [vmem:[%s289 + $0x20] sm:$0xff]
        %v305 = vld [vmem:[%s289 + $0x28] sm:$0xff]
        %v306 = vld [vmem:[%s289 + $0x30] sm:$0xff]
        %v307 = vld [vmem:[%s289 + $0x38] sm:$0xff]
        %v308 = vld [vmem:[%s1] sm:$0xff]
        %v309 = vld [vmem:[%s1 + $0x8] sm:$0xff]
        %v310 = vld [vmem:[%s1 + $0x10] sm:$0xff]
        %v311 = vld [vmem:[%s1 + $0x18] sm:$0xff]
        %v312 = vld [vmem:[%s2] sm:$0x1]
        %v314 = vlaneseq
        %v315 = vshrl.u32 %v314, 7
        %v316 = vsub.s32 0, %v315
        %v317 = vrot.slane %v312, %v316
        %vm319 = vcmask 261120
        %v321 = vsel %vm319, %v300, 0
        %v324 = vsel %vm319, %v301, 0
        %v327 = vsel %vm319, %v302, 0
        %v330 = vsel %vm319, %v303, 0
        %v333 = vsel %vm319, %v304, 0
        %v336 = vsel %vm319, %v305, 0
        %v339 = vsel %vm319, %v306, 0
        %v342 = vsel %vm319, %v307, 0
        %344 = vmatprep.subr.mxu0 0.0
        %345 = vmatpush1.msra.mxu0 %v308
        %346 = vmatprep.subr.mxu0 0.0
        %347 = vmatpush1.msra.mxu0 %v309
        %348 = vmatprep.subr.mxu0 0.0
        %349 = vmatpush1.msra.mxu0 %v310
        %350 = vmatprep.subr.mxu0 0.0
        %351 = vmatpush1.msra.mxu0 %v311
        %352 = vmatprep.subr.mxu0 0.0
        %353 = vmatpush1.msra.mxu0 0.0
        %354 = vmatprep.subr.mxu0 0.0
        %355 = vmatpush1.msra.mxu0 0.0
        %356 = vmatprep.subr.mxu0 0.0
        %357 = vmatpush1.msra.mxu0 0.0
        %358 = vmatprep.subr.mxu0 0.0
        %359 = vmatpush1.msra.mxu0 0.0
        %360 = vmatprep.subr.mxu0 0.0
        %361 = vmatpush1.msra.mxu0 0.0
        %362 = vmatprep.subr.mxu0 0.0
        %363 = vmatpush1.msra.mxu0 0.0
        %364 = vmatprep.subr.mxu0 0.0
        %365 = vmatpush1.msra.mxu0 0.0
        %366 = vmatprep.subr.mxu0 0.0
        %367 = vmatpush1.msra.mxu0 0.0
        %368 = vmatprep.subr.mxu0 0.0
        %369 = vmatpush1.msra.mxu0 0.0
        %370 = vmatprep.subr.mxu0 0.0
        %371 = vmatpush1.msra.mxu0 0.0
        %372 = vmatprep.subr.mxu0 0.0
        %373 = vmatpush1.msra.mxu0 0.0
        %374 = vmatprep.subr.mxu0 0.0
        %375 = vmatpush1.msra.mxu0 0.0
        %376 = vmatprep.subr.mxu0 0.0
        %377 = vmatpush1.msra.mxu0 0.0
        %378 = vmatprep.subr.mxu0 0.0
        %379 = vmatpush1.msra.mxu0 0.0
        %380 = vmatprep.subr.mxu0 0.0
        %381 = vmatpush1.msra.mxu0 0.0
        %382 = vmatprep.subr.mxu0 0.0
        %383 = vmatpush1.msra.mxu0 0.0
        %384 = vmatprep.subr.mxu0 0.0
        %385 = vmatpush1.msra.mxu0 0.0
        %386 = vmatprep.subr.mxu0 0.0
        %387 = vmatpush1.msra.mxu0 0.0
        %388 = vmatprep.subr.mxu0 0.0
        %389 = vmatpush1.msra.mxu0 0.0
        %390 = vmatprep.subr.mxu0 0.0
        %391 = vmatpush1.msra.mxu0 0.0
        %392 = vmatprep.subr.mxu0 0.0
        %393 = vmatpush1.msra.mxu0 0.0
        %394 = vmatprep.subr.mxu0 0.0
        %395 = vmatpush1.msra.mxu0 0.0
        %396 = vmatprep.subr.mxu0 0.0
        %397 = vmatpush1.msra.mxu0 0.0
        %398 = vmatprep.subr.mxu0 0.0
        %399 = vmatpush1.msra.mxu0 0.0
        %400 = vmatprep.subr.mxu0 0.0
        %401 = vmatpush1.msra.mxu0 0.0
        %402 = vmatprep.subr.mxu0 0.0
        %403 = vmatpush1.msra.mxu0 0.0
        %404 = vmatprep.subr.mxu0 0.0
        %405 = vmatpush1.msra.mxu0 0.0
        %406 = vmatprep.subr.mxu0 0.0
        %407 = vmatpush1.msra.mxu0 0.0
        %408 = vmatprep.mubr.f32.mxu0 0.0
        %409 = vmatmul.mubr.f32.gmra.mrb[0].mxu0 %v321
        %v410 = vpop.f32.mrb[0].mxu0
        %v411 = vadd.f32 %v317, %v410
        %v412 = vpop.f32.mrb[0].mxu0
        %413 = vmatprep.mubr.f32.mxu0 0.0
        %414 = vmatmul.mubr.f32.gmra.mrb[0].mxu0 %v324
        %v415 = vpop.f32.mrb[0].mxu0
        %v416 = vadd.f32 %v317, %v415
        %v417 = vpop.f32.mrb[0].mxu0
        %418 = vmatprep.mubr.f32.mxu0 0.0
        %419 = vmatmul.mubr.f32.gmra.mrb[0].mxu0 %v327
        %v420 = vpop.f32.mrb[0].mxu0
        %v421 = vadd.f32 %v317, %v420
        %v422 = vpop.f32.mrb[0].mxu0
        %423 = vmatprep.mubr.f32.mxu0 0.0
        %424 = vmatmul.mubr.f32.gmra.mrb[0].mxu0 %v330
        %v425 = vpop.f32.mrb[0].mxu0
        %v426 = vadd.f32 %v317, %v425
        %v427 = vpop.f32.mrb[0].mxu0
        %428 = vmatprep.mubr.f32.mxu0 0.0
        %429 = vmatmul.mubr.f32.gmra.mrb[0].mxu0 %v333
        %v430 = vpop.f32.mrb[0].mxu0
        %v431 = vadd.f32 %v317, %v430
        %v432 = vpop.f32.mrb[0].mxu0
        %433 = vmatprep.mubr.f32.mxu0 0.0
        %434 = vmatmul.mubr.f32.gmra.mrb[0].mxu0 %v336
        %v435 = vpop.f32.mrb[0].mxu0
        %v436 = vadd.f32 %v317, %v435
        %v437 = vpop.f32.mrb[0].mxu0
        %438 = vmatprep.mubr.f32.mxu0 0.0
        %439 = vmatmul.mubr.f32.gmra.mrb[0].mxu0 %v339
        %v440 = vpop.f32.mrb[0].mxu0
        %v441 = vadd.f32 %v317, %v440
        %v442 = vpop.f32.mrb[0].mxu0
        %443 = vmatprep.mubr.f32.mxu0 0.0
        %444 = vmatmul.mubr.f32.gmra.mrb[0].mxu0 %v342
        %v445 = vpop.f32.mrb[0].mxu0
        %v446 = vadd.f32 %v317, %v445
        %v447 = vpop.f32.mrb[0].mxu0
        %448 = vdwg.mxu0
        %v449 = vmax.f32 %v411, 0.0
        %v450 = vmax.f32 %v416, 0.0
        %v451 = vmax.f32 %v421, 0.0
        %v452 = vmax.f32 %v426, 0.0
        %v453 = vmax.f32 %v431, 0.0
        %v454 = vmax.f32 %v436, 0.0
        %v455 = vmax.f32 %v441, 0.0
        %v456 = vmax.f32 %v446, 0.0
        %v457 = vld [vmem:[%s3] sm:$0xff]
        %v458 = vld [vmem:[%s3 + $0x8] sm:$0xff]
        %v459 = vld [vmem:[%s3 + $0x10] sm:$0xff]
        %v460 = vld [vmem:[%s3 + $0x18] sm:$0xff]
        %v461 = vld [vmem:[%s3 + $0x20] sm:$0xff]
        %v462 = vld [vmem:[%s3 + $0x28] sm:$0xff]
        %v463 = vld [vmem:[%s3 + $0x30] sm:$0xff]
        %v464 = vld [vmem:[%s3 + $0x38] sm:$0xff]
        %v465 = vld [vmem:[%s4] sm:$0x1]
        %v467 = vlaneseq
        %v468 = vshrl.u32 %v467, 7
        %v469 = vsub.s32 0, %v468
        %v470 = vrot.slane %v465, %v469
        %vm472 = vcmask 523264
        %v474 = vsel %vm472, %v449, 0
        %v477 = vsel %vm472, %v450, 0
        %v480 = vsel %vm472, %v451, 0
        %v483 = vsel %vm472, %v452, 0
        %v486 = vsel %vm472, %v453, 0
        %v489 = vsel %vm472, %v454, 0
        %v492 = vsel %vm472, %v455, 0
        %v495 = vsel %vm472, %v456, 0
        %497 = vmatprep.subr.mxu0 0.0
        %498 = vmatpush1.msra.mxu0 %v457
        %499 = vmatprep.subr.mxu0 0.0
        %500 = vmatpush1.msra.mxu0 %v458
        %501 = vmatprep.subr.mxu0 0.0
        %502 = vmatpush1.msra.mxu0 %v459
        %503 = vmatprep.subr.mxu0 0.0
        %504 = vmatpush1.msra.mxu0 %v460
        %505 = vmatprep.subr.mxu0 0.0
        %506 = vmatpush1.msra.mxu0 %v461
        %507 = vmatprep.subr.mxu0 0.0
        %508 = vmatpush1.msra.mxu0 %v462
        %509 = vmatprep.subr.mxu0 0.0
        %510 = vmatpush1.msra.mxu0 %v463
        %511 = vmatprep.subr.mxu0 0.0
        %512 = vmatpush1.msra.mxu0 %v464
        %513 = vmatprep.subr.mxu0 0.0
        %514 = vmatpush1.msra.mxu0 0.0
        %515 = vmatprep.subr.mxu0 0.0
        %516 = vmatpush1.msra.mxu0 0.0
        %517 = vmatprep.subr.mxu0 0.0
        %518 = vmatpush1.msra.mxu0 0.0
        %519 = vmatprep.subr.mxu0 0.0
        %520 = vmatpush1.msra.mxu0 0.0
        %521 = vmatprep.subr.mxu0 0.0
        %522 = vmatpush1.msra.mxu0 0.0
        %523 = vmatprep.subr.mxu0 0.0
        %524 = vmatpush1.msra.mxu0 0.0
        %525 = vmatprep.subr.mxu0 0.0
        %526 = vmatpush1.msra.mxu0 0.0
        %527 = vmatprep.subr.mxu0 0.0
        %528 = vmatpush1.msra.mxu0 0.0
        %529 = vmatprep.subr.mxu0 0.0
        %530 = vmatpush1.msra.mxu0 0.0
        %531 = vmatprep.subr.mxu0 0.0
        %532 = vmatpush1.msra.mxu0 0.0
        %533 = vmatprep.subr.mxu0 0.0
        %534 = vmatpush1.msra.mxu0 0.0
        %535 = vmatprep.subr.mxu0 0.0
        %536 = vmatpush1.msra.mxu0 0.0
        %537 = vmatprep.subr.mxu0 0.0
        %538 = vmatpush1.msra.mxu0 0.0
        %539 = vmatprep.subr.mxu0 0.0
        %540 = vmatpush1.msra.mxu0 0.0
        %541 = vmatprep.subr.mxu0 0.0
        %542 = vmatpush1.msra.mxu0 0.0
        %543 = vmatprep.subr.mxu0 0.0
        %544 = vmatpush1.msra.mxu0 0.0
        %545 = vmatprep.subr.mxu0 0.0
        %546 = vmatpush1.msra.mxu0 0.0
        %547 = vmatprep.subr.mxu0 0.0
        %548 = vmatpush1.msra.mxu0 0.0
        %549 = vmatprep.subr.mxu0 0.0
        %550 = vmatpush1.msra.mxu0 0.0
        %551 = vmatprep.subr.mxu0 0.0
        %552 = vmatpush1.msra.mxu0 0.0
        %553 = vmatprep.subr.mxu0 0.0
        %554 = vmatpush1.msra.mxu0 0.0
        %555 = vmatprep.subr.mxu0 0.0
        %556 = vmatpush1.msra.mxu0 0.0
        %557 = vmatprep.subr.mxu0 0.0
        %558 = vmatpush1.msra.mxu0 0.0
        %559 = vmatprep.subr.mxu0 0.0
        %560 = vmatpush1.msra.mxu0 0.0
        %561 = vmatprep.mubr.f32.mxu0 0.0
        %562 = vmatmul.mubr.f32.gmra.mrb[0].mxu0 %v474
        %v563 = vpop.f32.mrb[0].mxu0
        %v564 = vadd.f32 %v470, %v563
        %v565 = vpop.f32.mrb[0].mxu0
        %566 = vmatprep.mubr.f32.mxu0 0.0
        %567 = vmatmul.mubr.f32.gmra.mrb[0].mxu0 %v477
        %v568 = vpop.f32.mrb[0].mxu0
        %v569 = vadd.f32 %v470, %v568
        %v570 = vpop.f32.mrb[0].mxu0
        %571 = vmatprep.mubr.f32.mxu0 0.0
        %572 = vmatmul.mubr.f32.gmra.mrb[0].mxu0 %v480
        %v573 = vpop.f32.mrb[0].mxu0
        %v574 = vadd.f32 %v470, %v573
        %v575 = vpop.f32.mrb[0].mxu0
        %576 = vmatprep.mubr.f32.mxu0 0.0
        %577 = vmatmul.mubr.f32.gmra.mrb[0].mxu0 %v483
        %v578 = vpop.f32.mrb[0].mxu0
        %v579 = vadd.f32 %v470, %v578
        %v580 = vpop.f32.mrb[0].mxu0
        %581 = vmatprep.mubr.f32.mxu0 0.0
        %582 = vmatmul.mubr.f32.gmra.mrb[0].mxu0 %v486
        %v583 = vpop.f32.mrb[0].mxu0
        %v584 = vadd.f32 %v470, %v583
        %v585 = vpop.f32.mrb[0].mxu0
        %586 = vmatprep.mubr.f32.mxu0 0.0
        %587 = vmatmul.mubr.f32.gmra.mrb[0].mxu0 %v489
        %v588 = vpop.f32.mrb[0].mxu0
        %v589 = vadd.f32 %v470, %v588
        %v590 = vpop.f32.mrb[0].mxu0
        %591 = vmatprep.mubr.f32.mxu0 0.0
        %592 = vmatmul.mubr.f32.gmra.mrb[0].mxu0 %v492
        %v593 = vpop.f32.mrb[0].mxu0
        %v594 = vadd.f32 %v470, %v593
        %v595 = vpop.f32.mrb[0].mxu0
        %596 = vmatprep.mubr.f32.mxu0 0.0
        %597 = vmatmul.mubr.f32.gmra.mrb[0].mxu0 %v495
        %v598 = vpop.f32.mrb[0].mxu0
        %v599 = vadd.f32 %v470, %v598
        %v600 = vpop.f32.mrb[0].mxu0
        %601 = vdwg.mxu0
        %v602 = vmax.f32 %v564, 0.0
        %v603 = vmax.f32 %v569, 0.0
        %v604 = vmax.f32 %v574, 0.0
        %v605 = vmax.f32 %v579, 0.0
        %v606 = vmax.f32 %v584, 0.0
        %v607 = vmax.f32 %v589, 0.0
        %v608 = vmax.f32 %v594, 0.0
        %v609 = vmax.f32 %v599, 0.0
        %v610 = vld [vmem:[%s5] sm:$0xff]
        %v611 = vld [vmem:[%s5 + $0x8] sm:$0xff]
        %v612 = vld [vmem:[%s5 + $0x10] sm:$0xff]
        %v613 = vld [vmem:[%s5 + $0x18] sm:$0xff]
        %v614 = vld [vmem:[%s5 + $0x20] sm:$0xff]
        %v615 = vld [vmem:[%s5 + $0x28] sm:$0xff]
        %v616 = vld [vmem:[%s5 + $0x30] sm:$0xff]
        %v617 = vld [vmem:[%s5 + $0x38] sm:$0xff]
        %v618 = vld [vmem:[%s6] sm:$0x1]
        %v620 = vlaneseq
        %v621 = vshrl.u32 %v620, 7
        %v622 = vsub.s32 0, %v621
        %v623 = vrot.slane %v618, %v622
        %v626 = vsel %vm472, %v602, 0
        %v629 = vsel %vm472, %v603, 0
        %v632 = vsel %vm472, %v604, 0
        %v635 = vsel %vm472, %v605, 0
        %v638 = vsel %vm472, %v606, 0
        %v641 = vsel %vm472, %v607, 0
        %v644 = vsel %vm472, %v608, 0
        %v647 = vsel %vm472, %v609, 0
        %649 = vmatprep.subr.mxu0 0.0
        %650 = vmatpush1.msra.mxu0 %v610
        %651 = vmatprep.subr.mxu0 0.0
        %652 = vmatpush1.msra.mxu0 %v611
        %653 = vmatprep.subr.mxu0 0.0
        %654 = vmatpush1.msra.mxu0 %v612
        %655 = vmatprep.subr.mxu0 0.0
        %656 = vmatpush1.msra.mxu0 %v613
        %657 = vmatprep.subr.mxu0 0.0
        %658 = vmatpush1.msra.mxu0 %v614
        %659 = vmatprep.subr.mxu0 0.0
        %660 = vmatpush1.msra.mxu0 %v615
        %661 = vmatprep.subr.mxu0 0.0
        %662 = vmatpush1.msra.mxu0 %v616
        %663 = vmatprep.subr.mxu0 0.0
        %664 = vmatpush1.msra.mxu0 %v617
        %665 = vmatprep.subr.mxu0 0.0
        %666 = vmatpush1.msra.mxu0 0.0
        %667 = vmatprep.subr.mxu0 0.0
        %668 = vmatpush1.msra.mxu0 0.0
        %669 = vmatprep.subr.mxu0 0.0
        %670 = vmatpush1.msra.mxu0 0.0
        %671 = vmatprep.subr.mxu0 0.0
        %672 = vmatpush1.msra.mxu0 0.0
        %673 = vmatprep.subr.mxu0 0.0
        %674 = vmatpush1.msra.mxu0 0.0
        %675 = vmatprep.subr.mxu0 0.0
        %676 = vmatpush1.msra.mxu0 0.0
        %677 = vmatprep.subr.mxu0 0.0
        %678 = vmatpush1.msra.mxu0 0.0
        %679 = vmatprep.subr.mxu0 0.0
        %680 = vmatpush1.msra.mxu0 0.0
        %681 = vmatprep.subr.mxu0 0.0
        %682 = vmatpush1.msra.mxu0 0.0
        %683 = vmatprep.subr.mxu0 0.0
        %684 = vmatpush1.msra.mxu0 0.0
        %685 = vmatprep.subr.mxu0 0.0
        %686 = vmatpush1.msra.mxu0 0.0
        %687 = vmatprep.subr.mxu0 0.0
        %688 = vmatpush1.msra.mxu0 0.0
        %689 = vmatprep.subr.mxu0 0.0
        %690 = vmatpush1.msra.mxu0 0.0
        %691 = vmatprep.subr.mxu0 0.0
        %692 = vmatpush1.msra.mxu0 0.0
        %693 = vmatprep.subr.mxu0 0.0
        %694 = vmatpush1.msra.mxu0 0.0
        %695 = vmatprep.subr.mxu0 0.0
        %696 = vmatpush1.msra.mxu0 0.0
        %697 = vmatprep.subr.mxu0 0.0
        %698 = vmatpush1.msra.mxu0 0.0
        %699 = vmatprep.subr.mxu0 0.0
        %700 = vmatpush1.msra.mxu0 0.0
        %701 = vmatprep.subr.mxu0 0.0
        %702 = vmatpush1.msra.mxu0 0.0
        %703 = vmatprep.subr.mxu0 0.0
        %704 = vmatpush1.msra.mxu0 0.0
        %705 = vmatprep.subr.mxu0 0.0
        %706 = vmatpush1.msra.mxu0 0.0
        %707 = vmatprep.subr.mxu0 0.0
        %708 = vmatpush1.msra.mxu0 0.0
        %709 = vmatprep.subr.mxu0 0.0
        %710 = vmatpush1.msra.mxu0 0.0
        %711 = vmatprep.subr.mxu0 0.0
        %712 = vmatpush1.msra.mxu0 0.0
        %713 = vmatprep.mubr.f32.mxu0 0.0
        %714 = vmatmul.mubr.f32.gmra.mrb[0].mxu0 %v626
        %v715 = vpop.f32.mrb[0].mxu0
        %v716 = vadd.f32 %v623, %v715
        %v717 = vpop.f32.mrb[0].mxu0
        %718 = vmatprep.mubr.f32.mxu0 0.0
        %719 = vmatmul.mubr.f32.gmra.mrb[0].mxu0 %v629
        %v720 = vpop.f32.mrb[0].mxu0
        %v721 = vadd.f32 %v623, %v720
        %v722 = vpop.f32.mrb[0].mxu0
        %723 = vmatprep.mubr.f32.mxu0 0.0
        %724 = vmatmul.mubr.f32.gmra.mrb[0].mxu0 %v632
        %v725 = vpop.f32.mrb[0].mxu0
        %v726 = vadd.f32 %v623, %v725
        %v727 = vpop.f32.mrb[0].mxu0
        %728 = vmatprep.mubr.f32.mxu0 0.0
        %729 = vmatmul.mubr.f32.gmra.mrb[0].mxu0 %v635
        %v730 = vpop.f32.mrb[0].mxu0
        %v731 = vadd.f32 %v623, %v730
        %v732 = vpop.f32.mrb[0].mxu0
        %733 = vmatprep.mubr.f32.mxu0 0.0
        %734 = vmatmul.mubr.f32.gmra.mrb[0].mxu0 %v638
        %v735 = vpop.f32.mrb[0].mxu0
        %v736 = vadd.f32 %v623, %v735
        %v737 = vpop.f32.mrb[0].mxu0
        %738 = vmatprep.mubr.f32.mxu0 0.0
        %739 = vmatmul.mubr.f32.gmra.mrb[0].mxu0 %v641
        %v740 = vpop.f32.mrb[0].mxu0
        %v741 = vadd.f32 %v623, %v740
        %v742 = vpop.f32.mrb[0].mxu0
        %743 = vmatprep.mubr.f32.mxu0 0.0
        %744 = vmatmul.mubr.f32.gmra.mrb[0].mxu0 %v644
        %v745 = vpop.f32.mrb[0].mxu0
        %v746 = vadd.f32 %v623, %v745
        %v747 = vpop.f32.mrb[0].mxu0
        %748 = vmatprep.mubr.f32.mxu0 0.0
        %749 = vmatmul.mubr.f32.gmra.mrb[0].mxu0 %v647
        %v750 = vpop.f32.mrb[0].mxu0
        %v751 = vadd.f32 %v623, %v750
        %v752 = vpop.f32.mrb[0].mxu0
        %753 = vdwg.mxu0
        %v754 = vmax.f32 %v716, 0.0
        %v755 = vmax.f32 %v721, 0.0
        %v756 = vmax.f32 %v726, 0.0
        %v757 = vmax.f32 %v731, 0.0
        %v758 = vmax.f32 %v736, 0.0
        %v759 = vmax.f32 %v741, 0.0
        %v760 = vmax.f32 %v746, 0.0
        %v761 = vmax.f32 %v751, 0.0
        %vm762 = vcmask 130048
        %v763 = vsel %vm762, %v754, -inf
        %764 = vmax.xlane.f32.xlu0 %v763
        %v765 = vpop.xlane.xlu0 %764
        %v766 = vsel %vm762, %v755, -inf
        %767 = vmax.xlane.f32.xlu0 %v766
        %v768 = vpop.xlane.xlu0 %767
        %v769 = vsel %vm762, %v756, -inf
        %770 = vmax.xlane.f32.xlu0 %v769
        %v771 = vpop.xlane.xlu0 %770
        %v772 = vsel %vm762, %v757, -inf
        %773 = vmax.xlane.f32.xlu0 %v772
        %v774 = vpop.xlane.xlu0 %773
        %v775 = vsel %vm762, %v758, -inf
        %776 = vmax.xlane.f32.xlu0 %v775
        %v777 = vpop.xlane.xlu0 %776
        %v778 = vsel %vm762, %v759, -inf
        %779 = vmax.xlane.f32.xlu0 %v778
        %v780 = vpop.xlane.xlu0 %779
        %v781 = vsel %vm762, %v760, -inf
        %782 = vmax.xlane.f32.xlu0 %v781
        %v783 = vpop.xlane.xlu0 %782
        %v784 = vsel %vm762, %v761, -inf
        %785 = vmax.xlane.f32.xlu0 %v784
        %v786 = vpop.xlane.xlu0 %785
        %v787 = vsub.f32 %v754, %v765
        %v788 = vsub.f32 %v755, %v768
        %v789 = vsub.f32 %v756, %v771
        %v790 = vsub.f32 %v757, %v774
        %v791 = vsub.f32 %v758, %v777
        %v792 = vsub.f32 %v759, %v780
        %v793 = vsub.f32 %v760, %v783
        %v794 = vsub.f32 %v761, %v786
        %v795 = vmul.f32 %v787, 1.442695
        %v796 = vpow.pop %v795
        %v797 = vmul.f32 %v788, 1.442695
        %v798 = vpow.pop %v797
        %v799 = vmul.f32 %v789, 1.442695
        %v800 = vpow.pop %v799
        %v801 = vmul.f32 %v790, 1.442695
        %v802 = vpow.pop %v801
        %v803 = vmul.f32 %v791, 1.442695
        %v804 = vpow.pop %v803
        %v805 = vmul.f32 %v792, 1.442695
        %v806 = vpow.pop %v805
        %v807 = vmul.f32 %v793, 1.442695
        %v808 = vpow.pop %v807
        %v809 = vmul.f32 %v794, 1.442695
        %v810 = vpow.pop %v809
        %v811 = vsel %vm762, %v796, 0.0
        %812 = vadd.xlane.f32.xlu0 %v811
        %v813 = vpop.xlane.xlu0 %812
        %v814 = vsel %vm762, %v798, 0.0
        %815 = vadd.xlane.f32.xlu0 %v814
        %v816 = vpop.xlane.xlu0 %815
        %v817 = vsel %vm762, %v800, 0.0
        %818 = vadd.xlane.f32.xlu0 %v817
        %v819 = vpop.xlane.xlu0 %818
        %v820 = vsel %vm762, %v802, 0.0
        %821 = vadd.xlane.f32.xlu0 %v820
        %v822 = vpop.xlane.xlu0 %821
        %v823 = vsel %vm762, %v804, 0.0
        %824 = vadd.xlane.f32.xlu0 %v823
        %v825 = vpop.xlane.xlu0 %824
        %v826 = vsel %vm762, %v806, 0.0
        %827 = vadd.xlane.f32.xlu0 %v826
        %v828 = vpop.xlane.xlu0 %827
        %v829 = vsel %vm762, %v808, 0.0
        %830 = vadd.xlane.f32.xlu0 %v829
        %v831 = vpop.xlane.xlu0 %830
        %v832 = vsel %vm762, %v810, 0.0
        %833 = vadd.xlane.f32.xlu0 %v832
        %v834 = vpop.xlane.xlu0 %833
        %v835 = vrcp.pop %v813
        %v836 = vmul.f32 %v796, %v835
        %v837 = vrcp.pop %v816
        %v838 = vmul.f32 %v798, %v837
        %v839 = vrcp.pop %v819
        %v840 = vmul.f32 %v800, %v839
        %v841 = vrcp.pop %v822
        %v842 = vmul.f32 %v802, %v841
        %v843 = vrcp.pop %v825
        %v844 = vmul.f32 %v804, %v843
        %v845 = vrcp.pop %v828
        %v846 = vmul.f32 %v806, %v845
        %v847 = vrcp.pop %v831
        %v848 = vmul.f32 %v808, %v847
        %v849 = vrcp.pop %v834
        %v850 = vmul.f32 %v810, %v849
        %851 = vst.msk [vmem:[%s280] sm:$0xff] %vm762, %v836
        %852 = vst.msk [vmem:[%s280 + $0x8] sm:$0xff] %vm762, %v838
        %853 = vst.msk [vmem:[%s280 + $0x10] sm:$0xff] %vm762, %v840
        %854 = vst.msk [vmem:[%s280 + $0x18] sm:$0xff] %vm762, %v842
        %855 = vst.msk [vmem:[%s280 + $0x20] sm:$0xff] %vm762, %v844
        %856 = vst.msk [vmem:[%s280 + $0x28] sm:$0xff] %vm762, %v846
        %857 = vst.msk [vmem:[%s280 + $0x30] sm:$0xff] %vm762, %v848
        %858 = vst.msk [vmem:[%s280 + $0x38] sm:$0xff] %vm762, %v850
        %s859 = sand.u32 %s178, 1
        %s860 = sand.u32 %s178, 1
        %s861 = smul.addr %s860, 64
        %s862 = scalar_lea.vmem [#allocation2], %s861
        // Predicated region
        $region49: #{tpu_custom_call.1} parent=47 // pred_check
          %p863 = pneg %p188
        $region50: #{tpu_custom_call.1} parent=47 // pred_check_branch
          %865 = sbr.rel (%p863) target = $region52
        $region51: #{tpu_custom_call.1} parent=47 // pred_region
          %s866 = smul.u32 8, %s18
          %s867 = ssub.s32 25, %s866
          %p868 = scmp.lt.s32.totalorder %s867, 8
          %s869 = scalar_select %p868, %s867, 8
          %s870 = smul.u32 128, %s869
          %p871 = scmp.ne.s32.totalorder 0, %s870
          %s872 = smul.addr %s866, 8
          %s873 = scalar_lea.vmem %s7, %s872
          // Predicated region
          $region53: #{tpu_custom_call.1} parent=51 // pred_check
            %p874 = pneg %p871
          $region54: #{tpu_custom_call.1} parent=51 // pred_check_branch
            %876 = sbr.rel (%p874) target = $region56
          $region55: #{tpu_custom_call.1} parent=51 // pred_region
            // Predicated region
            $region57: #{tpu_custom_call.1} parent=55 // pred_check
              _
            $region58: #{tpu_custom_call.1} parent=55 // pred_check_branch
              %878 = sbr.rel (0) target = $region60
            $region59: #{tpu_custom_call.1} parent=55 // pred_region
              // Predicated region
              $region79: #{tpu_custom_call.1} parent=59 // pred_check
                _
              $region80: #{tpu_custom_call.1} parent=59 // pred_check_branch
                %941 = sbr.rel (0) target = $region82
              $region81: #{tpu_custom_call.1} parent=59 // pred_region
                %s942 = sshrl.u32 %s869, 3
                // While loop
                $region83: #{tpu_custom_call.1} parent=81 // loop_pre_header
                  _
                $region84: #{tpu_custom_call.1} parent=81 // loop_header
                  %s944 = sphi 0, %s946
                  %p945 = scmp.ge.s32.totalorder %s944, %s942
                  %s949 = sphi 0, %s970
                  %s950 = sphi %s862, %s973
                  %s951 = sphi %s873, %s974
                $region85: #{tpu_custom_call.1} parent=81 // loop_header_branch
                  %948 = sbr.rel (%p945) target = $region89
                $region86: #{tpu_custom_call.1} parent=81 // loop_body
                  %v952 = vld [vmem:[%s950] sm:$0xff]
                  %953 = vst [vmem:[%s951] sm:$0xff] %v952
                  %v954 = vld [vmem:[%s950 + $0x8] sm:$0xff]
                  %955 = vst [vmem:[%s951 + $0x8] sm:$0xff] %v954
                  %v956 = vld [vmem:[%s950 + $0x10] sm:$0xff]
                  %957 = vst [vmem:[%s951 + $0x10] sm:$0xff] %v956
                  %v958 = vld [vmem:[%s950 + $0x18] sm:$0xff]
                  %959 = vst [vmem:[%s951 + $0x18] sm:$0xff] %v958
                  %v960 = vld [vmem:[%s950 + $0x20] sm:$0xff]
                  %961 = vst [vmem:[%s951 + $0x20] sm:$0xff] %v960
                  %v962 = vld [vmem:[%s950 + $0x28] sm:$0xff]
                  %963 = vst [vmem:[%s951 + $0x28] sm:$0xff] %v962
                  %v964 = vld [vmem:[%s950 + $0x30] sm:$0xff]
                  %965 = vst [vmem:[%s951 + $0x30] sm:$0xff] %v964
                  %v966 = vld [vmem:[%s950 + $0x38] sm:$0xff]
                  %967 = vst [vmem:[%s951 + $0x38] sm:$0xff] %v966
                  %s968 = sadd.s32 1, %s949
                  %p969 = scmp.ge.s32.totalorder %s968, %s942
                  %s970 = scalar_select %p969, 0, %s968
                  %s971 = smul.u32 %s970, 64
                  %s972 = smul.u32 %s970, 64
                  %s973 = scalar_lea.vmem %s862, %s971 [#allocation2]
                  %s974 = scalar_lea.vmem %s873, %s972
                $region87: #{tpu_custom_call.1} parent=81 // loop_footer
                  %s946 = sadd.s32 %s944, 1
                $region88: #{tpu_custom_call.1} parent=81 // loop_footer_branch
                  %943 = sbr.rel target = $region84
                $region89: #{tpu_custom_call.1} parent=81 // loop_exit
                  _
                %s975 = sshrl.u32 %s869, 3
                %s976 = sand.u32 %s869, 7
                %s977 = smul.u32 %s975, 8
                %s978 = smul.u32 8, %s977
                %s979 = scalar_lea.vmem %s862, %s978 [#allocation2]
                %s980 = smul.u32 8, %s977
                %s981 = scalar_lea.vmem %s873, %s980
                // While loop
                $region90: #{tpu_custom_call.1} parent=81 // loop_pre_header
                  _
                $region91: #{tpu_custom_call.1} parent=81 // loop_header
                  %s983 = sphi 0, %s985
                  %p984 = scmp.ge.s32.totalorder %s983, %s976
                  %s988 = sphi 0, %s995
                  %s989 = sphi %s979, %s998
                  %s990 = sphi %s981, %s999
                $region92: #{tpu_custom_call.1} parent=81 // loop_header_branch
                  %987 = sbr.rel (%p984) target = $region96
                $region93: #{tpu_custom_call.1} parent=81 // loop_body
                  %v991 = vld [vmem:[%s989] sm:$0xff]
                  %992 = vst [vmem:[%s990] sm:$0xff] %v991
                  %s993 = sadd.s32 1, %s988
                  %p994 = scmp.ge.s32.totalorder %s993, %s976
                  %s995 = scalar_select %p994, 0, %s993
                  %s996 = smul.u32 %s995, 8
                  %s997 = smul.u32 %s995, 8
                  %s998 = scalar_lea.vmem %s979, %s996 [#allocation2]
                  %s999 = scalar_lea.vmem %s981, %s997
                $region94: #{tpu_custom_call.1} parent=81 // loop_footer
                  %s985 = sadd.s32 %s983, 1
                $region95: #{tpu_custom_call.1} parent=81 // loop_footer_branch
                  %982 = sbr.rel target = $region91
                $region96: #{tpu_custom_call.1} parent=81 // loop_exit
                  _
              $region82: #{tpu_custom_call.1} parent=59 // pred_fallthru
                _
              // Predicated region
              $region97: #{tpu_custom_call.1} parent=59 // pred_check
                _
              $region98: #{tpu_custom_call.1} parent=59 // pred_check_branch
                %1001 = sbr.rel target = $region100
              $region99: #{tpu_custom_call.1} parent=59 // pred_region
                _
              $region100: #{tpu_custom_call.1} parent=59 // pred_fallthru
                _
            $region60: #{tpu_custom_call.1} parent=55 // pred_fallthru
              _
            // Predicated region
            $region61: #{tpu_custom_call.1} parent=55 // pred_check
              _
            $region62: #{tpu_custom_call.1} parent=55 // pred_check_branch
              %880 = sbr.rel target = $region64
            $region63: #{tpu_custom_call.1} parent=55 // pred_region
              %s882 = sshrl.u32 %s869, 3
              // While loop
              $region65: #{tpu_custom_call.1} parent=63 // loop_pre_header
                _
              $region66: #{tpu_custom_call.1} parent=63 // loop_header
                %s884 = sphi 0, %s886
                %p885 = scmp.ge.s32.totalorder %s884, %s882
                %s889 = sphi 0, %s910
                %s890 = sphi %s862, %s913
                %s891 = sphi %s873, %s914
              $region67: #{tpu_custom_call.1} parent=63 // loop_header_branch
                %888 = sbr.rel (%p885) target = $region71
              $region68: #{tpu_custom_call.1} parent=63 // loop_body
                %v892 = vld [vmem:[%s890] sm:$0xff]
                %893 = vst [vmem:[%s891] sm:$0xff] %v892
                %v894 = vld [vmem:[%s890 + $0x8] sm:$0xff]
                %895 = vst [vmem:[%s891 + $0x8] sm:$0xff] %v894
                %v896 = vld [vmem:[%s890 + $0x10] sm:$0xff]
                %897 = vst [vmem:[%s891 + $0x10] sm:$0xff] %v896
                %v898 = vld [vmem:[%s890 + $0x18] sm:$0xff]
                %899 = vst [vmem:[%s891 + $0x18] sm:$0xff] %v898
                %v900 = vld [vmem:[%s890 + $0x20] sm:$0xff]
                %901 = vst [vmem:[%s891 + $0x20] sm:$0xff] %v900
                %v902 = vld [vmem:[%s890 + $0x28] sm:$0xff]
                %903 = vst [vmem:[%s891 + $0x28] sm:$0xff] %v902
                %v904 = vld [vmem:[%s890 + $0x30] sm:$0xff]
                %905 = vst [vmem:[%s891 + $0x30] sm:$0xff] %v904
                %v906 = vld [vmem:[%s890 + $0x38] sm:$0xff]
                %907 = vst [vmem:[%s891 + $0x38] sm:$0xff] %v906
                %s908 = sadd.s32 1, %s889
                %p909 = scmp.ge.s32.totalorder %s908, %s882
                %s910 = scalar_select %p909, 0, %s908
                %s911 = smul.u32 %s910, 64
                %s912 = smul.u32 %s910, 64
                %s913 = scalar_lea.vmem %s862, %s911 [#allocation2]
                %s914 = scalar_lea.vmem %s873, %s912
              $region69: #{tpu_custom_call.1} parent=63 // loop_footer
                %s886 = sadd.s32 %s884, 1
              $region70: #{tpu_custom_call.1} parent=63 // loop_footer_branch
                %883 = sbr.rel target = $region66
              $region71: #{tpu_custom_call.1} parent=63 // loop_exit
                _
              %s915 = sshrl.u32 %s869, 3
              %s916 = sand.u32 %s869, 7
              %s917 = smul.u32 %s915, 8
              %s918 = smul.u32 8, %s917
              %s919 = scalar_lea.vmem %s862, %s918 [#allocation2]
              %s920 = smul.u32 8, %s917
              %s921 = scalar_lea.vmem %s873, %s920
              // While loop
              $region72: #{tpu_custom_call.1} parent=63 // loop_pre_header
                _
              $region73: #{tpu_custom_call.1} parent=63 // loop_header
                %s923 = sphi 0, %s925
                %p924 = scmp.ge.s32.totalorder %s923, %s916
                %s928 = sphi 0, %s935
                %s929 = sphi %s919, %s938
                %s930 = sphi %s921, %s939
              $region74: #{tpu_custom_call.1} parent=63 // loop_header_branch
                %927 = sbr.rel (%p924) target = $region78
              $region75: #{tpu_custom_call.1} parent=63 // loop_body
                %v931 = vld [vmem:[%s929] sm:$0xff]
                %932 = vst [vmem:[%s930] sm:$0xff] %v931
                %s933 = sadd.s32 1, %s928
                %p934 = scmp.ge.s32.totalorder %s933, %s916
                %s935 = scalar_select %p934, 0, %s933
                %s936 = smul.u32 %s935, 8
                %s937 = smul.u32 %s935, 8
                %s938 = scalar_lea.vmem %s919, %s936 [#allocation2]
                %s939 = scalar_lea.vmem %s921, %s937
              $region76: #{tpu_custom_call.1} parent=63 // loop_footer
                %s925 = sadd.s32 %s923, 1
              $region77: #{tpu_custom_call.1} parent=63 // loop_footer_branch
                %922 = sbr.rel target = $region73
              $region78: #{tpu_custom_call.1} parent=63 // loop_exit
                _
            $region64: #{tpu_custom_call.1} parent=55 // pred_fallthru
              _
          $region56: #{tpu_custom_call.1} parent=51 // pred_fallthru
            _
          %1002 = vnop
        $region52: #{tpu_custom_call.1} parent=47 // pred_fallthru
          _
      $region48: #{tpu_custom_call.1} parent=5 // pred_fallthru
        _
      %p1003 = scmp.le.s32.totalorder 2, %s13
      // Predicated region
      $region101: #{tpu_custom_call.1} parent=5 // pred_check
        %p1004 = pneg %p1003
      $region102: #{tpu_custom_call.1} parent=5 // pred_check_branch
        %1006 = sbr.rel (%p1004) target = $region104
      $region103: #{tpu_custom_call.1} parent=5 // pred_region
        %s1007 = ssub.s32 %s13, 2
        // Predicated region
        $region105: #{tpu_custom_call.1} parent=103 // pred_check
          %p1008 = pneg %p194
        $region106: #{tpu_custom_call.1} parent=103 // pred_check_branch
          %1010 = sbr.rel (%p1008) target = $region108
        $region107: #{tpu_custom_call.1} parent=103 // pred_region
          %s1011 = sand.u32 %s179, 1
          %s1012 = sand.u32 %s179, 1
          %s1013 = smul.addr %s1012, 64
          %s1014 = scalar_lea.vmem [#allocation2], %s1013
        $region108: #{tpu_custom_call.1} parent=103 // pred_fallthru
          _
      $region104: #{tpu_custom_call.1} parent=5 // pred_fallthru
        _
    $region6: #{tpu_custom_call.1} parent=1 // loop_footer
      %s17 = sadd.s32 1, %s13
    $region7: #{tpu_custom_call.1} parent=1 // loop_footer_branch
      %12 = sbr.rel target = $region3
    $region8: #{tpu_custom_call.1} parent=1 // loop_exit
      _

</llo_original>
